<compile_context>
chip_gen: v6e
topology: v6e:2x2x1
jax: 0.10.0
libtpu: 0.0.40
codegen_flags: <defaults>
</compile_context>

<pallas_src>
import functools

import numpy as np
import jax
import jax.numpy as jnp
from jax.experimental import pallas as pl
from jax.experimental.pallas import tpu as pltpu


def _cdiv(a, b):
    return -(-a // b)


def _round_up(v, m):
    return _cdiv(v, m) * m


# --------------------------------------------------------------------------
# Kernels
# --------------------------------------------------------------------------

def _gather_expand_kernel(x_ref, e_ref, o_ref):
    # x_ref: (R, g*W)        block of grouped source rows
    # e_ref: (g*W, g*s*s*W)  constant 0/1 expansion matrix (VMEM resident)
    # o_ref: (R, g*s*s*W)    lane-dense upsampled block
    o_ref[...] = jnp.dot(
        x_ref[...], e_ref[...], preferred_element_type=jnp.float32
    ).astype(o_ref.dtype)


def _gather_expand_bcast_kernel(x_ref, e_ref, o_ref):
    # x_ref: (R, wt)         column tile of source rows
    # e_ref: (wt, wt*s)      constant 0/1 width-expansion matrix
    # o_ref: (R, s, wt*s)    s H-copies written via a sublane broadcast
    y = jnp.dot(x_ref[...], e_ref[...], preferred_element_type=jnp.float32)
    o_ref[...] = jnp.broadcast_to(y[:, None, :], o_ref.shape).astype(o_ref.dtype)


# --------------------------------------------------------------------------
# Constant expansion matrices (built once in numpy, cached)
# --------------------------------------------------------------------------

@functools.lru_cache(maxsize=None)
def _width_expansion_np(w, s):
    """(W, W*s) 0/1 matrix: row @ Ew = nearest width-expanded row."""
    ws = w * s
    return (np.arange(w)[:, None] == (np.arange(ws)[None, :] // s)).astype(np.float32)


@functools.lru_cache(maxsize=None)
def _expansion_matrix_np(w, s, g):
    """(g*W, g*s*s*W) 0/1 matrix so that g grouped rows @ E = their upsampled rows."""
    ewt = _width_expansion_np(w, s)                # (W, Ws)
    e2 = np.tile(ewt, (1, s))                      # (W, s*Ws): s H-copies per row
    return np.kron(np.eye(g, dtype=np.float32), e2)


# --------------------------------------------------------------------------
# Heuristics
# --------------------------------------------------------------------------

def _divisors(n):
    ds = set()
    d = 1
    while d * d <= n:
        if n % d == 0:
            ds.add(d)
            ds.add(n // d)
        d += 1
    return sorted(ds)


def _choose_group(m_rows, w, s, itemsize, e_cap_bytes=2 << 20, k_cap=128):
    """Group size g for the kron path, or None if the W-tiled path should be used.

    Chosen for OUTPUT lane density (g*s*s*W >= 128, preferring a 128 multiple)
    while capping K = g*W so the one-hot matmul never becomes MXU-bound.
    """
    out_w = s * s * w

    def e_bytes(g):
        return (g * w) * (g * out_w) * itemsize

    divs = [g for g in _divisors(m_rows)
            if g * w <= k_cap and e_bytes(g) <= e_cap_bytes]
    if not divs:
        return None                                 # fall back to W-tiled path
    lane_ok = [g for g in divs if g * out_w >= 128]
    if not lane_ok:
        return max(divs)                            # best-effort lane density
    aligned = [g for g in lane_ok if (g * out_w) % 128 == 0]
    return min(aligned) if aligned else min(lane_ok)


def _vmem_policy():
    """(block budget bytes, vmem_limit_bytes, min grid steps) per generation."""
    kind = ""
    try:
        kind = jax.devices()[0].device_kind.lower()
    except Exception:  # pragma: no cover - defensive
        pass
    if ("v5" in kind) or ("v6" in kind):
        # 128 MiB physical VMEM: big blocks, few steps.
        return 48 << 20, 96 << 20, 3
    # v7x (64 MiB per TC) or unknown: conservative blocks, more steps per core.
    return 24 << 20, 48 << 20, 6


def _choose_block_rows(n_rows, row_in_bytes, row_out_bytes, sublane, budget,
                       min_steps, min_block_bytes=1 << 20):
    """Rows per block: sublane-multiple, VMEM-budgeted, cdiv-friendly."""
    per_row_buffered = 2 * (row_in_bytes + row_out_bytes)   # double-buffered in+out
    budget = max(budget, 4 << 20)
    cap = max(sublane, (budget // per_row_buffered) // sublane * sublane)
    # Aim for >= min_steps grid steps, but never shrink blocks below
    # ~min_block_bytes of data just to manufacture steps.
    tgt = max(sublane, _round_up(_cdiv(n_rows, min_steps), sublane))
    floor_rows = max(
        sublane,
        _round_up(_cdiv(min_block_bytes, row_in_bytes + row_out_bytes), sublane))
    r = min(cap, max(tgt, floor_rows))
    if r >= n_rows:
        return n_rows                                # full extent is always legal
    return r


# --------------------------------------------------------------------------
# Public wrapper (== UpsampleLayer.forward)
# --------------------------------------------------------------------------

def upsample_nearest(x, scale_factor, mode="nearest"):
    """Pallas equivalent of F.interpolate(x, scale_factor, mode='nearest'), NCHW."""
    if mode != "nearest":
        raise NotImplementedError("only mode='nearest' is implemented")
    s = int(scale_factor)
    if s != scale_factor or s < 1:
        raise NotImplementedError("only positive integer scale_factor is supported")

    N, C, H, W = x.shape
    if s == 1:
        return x
    Hs, Ws = H * s, W * s

    orig_dtype = x.dtype
    if not jnp.issubdtype(orig_dtype, jnp.floating):
        x = x.astype(jnp.float32)
    dtype = x.dtype
    itemsize = jnp.dtype(dtype).itemsize
    sublane = max(8, 32 // itemsize)         # 8 f32, 16 bf16, 32 int8/fp8

    budget, vmem_limit, min_steps = _vmem_policy()

    M = N * C * H                            # independent source rows
    out_w = s * s * W
    g = _choose_group(M, W, s, itemsize)

    if g is not None:
        # ---------- grouped (kron) path: small W, fully lane-dense output ----------
        gm = M // g
        in_cols = g * W
        out_cols = g * out_w
        e = jnp.asarray(_expansion_matrix_np(W, s, g), dtype=dtype)
        e_bytes = in_cols * out_cols * itemsize

        rows = _choose_block_rows(
            gm, in_cols * itemsize, out_cols * itemsize, sublane,
            budget - 2 * e_bytes, min_steps)
        grid = (_cdiv(gm, rows),)

        x2 = x.reshape(gm, in_cols)          # contiguous reshape (free)
        flops = 2 * gm * in_cols * out_cols
        bytes_acc = (gm * in_cols + gm * out_cols) * itemsize + e_bytes

        out2 = pl.pallas_call(
            _gather_expand_kernel,
            out_shape=jax.ShapeDtypeStruct((gm, out_cols), dtype),
            grid_spec=pltpu.PrefetchScalarGridSpec(
                num_scalar_prefetch=0,
                grid=grid,
                in_specs=[
                    pl.BlockSpec((rows, in_cols), lambda i: (i, 0)),
                    pl.BlockSpec((in_cols, out_cols), lambda i: (0, 0)),
                ],
                out_specs=pl.BlockSpec((rows, out_cols), lambda i: (i, 0)),
            ),
            compiler_params=pltpu.CompilerParams(
                dimension_semantics=("parallel",),
                vmem_limit_bytes=vmem_limit,
            ),
            cost_estimate=pl.CostEstimate(
                flops=flops, transcendentals=0, bytes_accessed=bytes_acc),
        )(x2, e)
        out = out2.reshape(N, C, Hs, Ws)     # contiguous reshape (free)
    else:
        # ---------- W-tiled path: large W, bounded K and bounded E ----------
        wt = 128 if W > 128 else W           # tile width (128-aligned or full W)
        e = jnp.asarray(_width_expansion_np(wt, s), dtype=dtype)
        e_bytes = wt * (wt * s) * itemsize

        row_in_bytes = wt * itemsize
        row_out_bytes = s * wt * s * itemsize
        rows = _choose_block_rows(
            M, row_in_bytes, row_out_bytes, sublane,
            budget - 2 * e_bytes, min_steps)
        nwt = _cdiv(W, wt)
        grid = (_cdiv(M, rows), nwt)

        x2 = x.reshape(M, W)                 # contiguous reshape (free)
        flops = 2 * M * wt * (wt * s) * nwt
        bytes_acc = (M * W + M * s * Ws) * itemsize + e_bytes

        out3 = pl.pallas_call(
            _gather_expand_bcast_kernel,
            out_shape=jax.ShapeDtypeStruct((M, s, Ws), dtype),
            grid_spec=pltpu.PrefetchScalarGridSpec(
                num_scalar_prefetch=0,
                grid=grid,
                in_specs=[
                    pl.BlockSpec((rows, wt), lambda i, j: (i, j)),
                    pl.BlockSpec((wt, wt * s), lambda i, j: (0, 0)),
                ],
                out_specs=pl.BlockSpec((rows, s, wt * s), lambda i, j: (i, 0, j)),
            ),
            compiler_params=pltpu.CompilerParams(
                dimension_semantics=("parallel", "parallel"),
                vmem_limit_bytes=vmem_limit,
            ),
            cost_estimate=pl.CostEstimate(
                flops=flops, transcendentals=0, bytes_accessed=bytes_acc),
        )(x2, e)
        out = out3.reshape(N, C, Hs, Ws)     # contiguous reshape (free)

    if out.dtype != orig_dtype:
        out = out.astype(orig_dtype)
    return out


# --------------------------------------------------------------------------
# Self-test
# --------------------------------------------------------------------------

if __name__ == "__main__":
    key = jax.random.PRNGKey(0)

    def _ref(x, s):
        # Nearest upsample with integer scale == repeat along H and W.
        return jnp.repeat(jnp.repeat(x, s, axis=2), s, axis=3)

    # Case 1: the module's nominal small shape (grouped / kron path).
    x1 = jax.random.normal(key, (2, 4, 16, 16), dtype=jnp.float32)
    o1 = jax.block_until_ready(upsample_nearest(x1, 2))
    assert o1.shape == (2, 4, 32, 32)
    assert jnp.allclose(o1, _ref(x1, 2)), "mismatch (grouped path, f32)"

    # Case 2: wide rows -> W-tiled / broadcast path.
    x2 = jax.random.normal(jax.random.PRNGKey(1), (1, 2, 8, 256), dtype=jnp.float32)
    o2 = jax.block_until_ready(upsample_nearest(x2, 2))
    assert o2.shape == (1, 2, 16, 512)
    assert jnp.allclose(o2, _ref(x2, 2)), "mismatch (W-tiled path, f32)"

    # Case 3: bf16 input (dtype-aware sublane packing on the grouped path).
    x3 = x1.astype(jnp.bfloat16)
    o3 = jax.block_until_ready(upsample_nearest(x3, 2))
    assert o3.dtype == jnp.bfloat16
    assert jnp.allclose(o3.astype(jnp.float32),
                        _ref(x3, 2).astype(jnp.float32)), "mismatch (grouped, bf16)"

    print("KERNEL_OK")
</pallas_src>

<mosaic_0001>
module attributes {stable_mosaic.version = 11 : i64} {
  func.func @_gather_expand_kernel(%arg0: i32, %arg1: memref<64x32xf32, #tpu.memory_space<vmem>>, %arg2: memref<32x128xf32, #tpu.memory_space<vmem>>, %arg3: memref<64x128xf32, #tpu.memory_space<vmem>>) attributes {dimension_semantics = [#tpu.dimension_semantics<parallel>], iteration_bounds = array<i64: 1>, scalar_prefetch = 0 : i64, scratch_operands = 0 : i64, tpu.core_type = #tpu.core_type<tc>, window_params = [{transform_indices = @transform_0, window_bounds = array<i64: 64, 32>}, {pipeline_mode = #tpu.pipeline_mode<synchronous>, transform_indices = @transform_1, window_bounds = array<i64: 32, 128>}, {transform_indices = @transform_2, window_bounds = array<i64: 64, 128>}]} {
    %c0 = arith.constant 0 : index
    %c0_0 = arith.constant 0 : index
    %0 = vector.load %arg1[%c0, %c0_0] : memref<64x32xf32, #tpu.memory_space<vmem>>, vector<64x32xf32>
    %c0_1 = arith.constant 0 : index
    %c0_2 = arith.constant 0 : index
    %1 = vector.load %arg2[%c0_1, %c0_2] : memref<32x128xf32, #tpu.memory_space<vmem>>, vector<32x128xf32>
    %cst = arith.constant dense<0.000000e+00> : vector<64x128xf32>
    %2 = tpu.matmul %0, %1, %cst {dimension_numbers = #tpu.dot_dimension_numbers<[1], [0], [0], [1], [0, 0, 1, 1], [], []>} : vector<64x32xf32>, vector<32x128xf32>, vector<64x128xf32> -> vector<64x128xf32>
    %c0_3 = arith.constant 0 : index
    %c0_4 = arith.constant 0 : index
    %3 = vector.load %arg3[%c0_3, %c0_4] : memref<64x128xf32, #tpu.memory_space<vmem>>, vector<64x128xf32>
    tpu.vector_store %arg3[%c0_3, %c0_4], %2 {strides = array<i32>} : memref<64x128xf32, #tpu.memory_space<vmem>>, vector<64x128xf32>,
    return
  }
  func.func @transform_0(%arg0: i32) -> (i32, i32) {
    %c0_i32 = arith.constant 0 : i32
    %c0_i32_0 = arith.constant 0 : i32
    return %arg0, %c0_i32 : i32, i32
  }
  func.func @transform_1(%arg0: i32) -> (i32, i32) {
    %c0_i32 = arith.constant 0 : i32
    %c0_i32_0 = arith.constant 0 : i32
    %c0_i32_1 = arith.constant 0 : i32
    return %c0_i32, %c0_i32_0 : i32, i32
  }
  func.func @transform_2(%arg0: i32) -> (i32, i32) {
    %c0_i32 = arith.constant 0 : i32
    %c0_i32_0 = arith.constant 0 : i32
    return %arg0, %c0_i32 : i32, i32
  }
}

</mosaic_0001>

<llo_original>
// kernel: tpu_custom_call.1
$region0: #{tpu_custom_call.1}
  #allocation0 [shape = 'u32[]', space=smem, size = 0x4, offset = 0x4, fixed_abs, tag = 'smem constant byte address 0x4 - core index']
  #allocation1 [shape = 'u32[144,128]{1,0:T(1,128)}', space=vmem, size = 0x12000, scoped, tag = 'internal scratch']
  %s0 = inlined_call_operand.vmem [shape: f32[64,32], index: 0, kind: input, shape index: {}]
  %s1 = inlined_call_operand.vmem [shape: f32[32,128], index: 1, kind: input, shape index: {}]
  %s2 = inlined_call_operand.hbm [shape: f32[64,128], index: 2, kind: output, shape index: {}]
  %s3 = sld [smem:[#allocation0]]
  $region18: #{tpu_custom_call.1} parent=0
    _
  %s5 = ssub.s32 1, %s3
  %s6 = scalar_select 0, %s5, %s3
  $region1: #{tpu_custom_call.1} parent=0
    #allocation2 [shape = 'u8[32768]{0}', space=vmem, size = 0x8000, scoped, tag = 'output window, operand 0, single buffered']
    #allocation3 [shape = 's32[1]{0}', space=sflag, size = 0x4, scoped, tag = 'scoped memory for tpu_custom_call.1']
    %7 = vsyncpa [#allocation3], 0
    // Predicated region
    $region2: #{tpu_custom_call.1} parent=1 // pred_check
      _
    $region3: #{tpu_custom_call.1} parent=1 // pred_check_branch
      %9 = sbr.rel (0) target = $region5
    $region4: #{tpu_custom_call.1} parent=1 // pred_region
      _
    $region5: #{tpu_custom_call.1} parent=1 // pred_fallthru
      _
    // Predicated region
    $region6: #{tpu_custom_call.1} parent=1 // pred_check
      _
    $region7: #{tpu_custom_call.1} parent=1 // pred_check_branch
      %11 = sbr.rel (0) target = $region9
    $region8: #{tpu_custom_call.1} parent=1 // pred_region
      _
    $region9: #{tpu_custom_call.1} parent=1 // pred_fallthru
      _
    %v12 = vld [vmem:[%s0] sm:$0xff]
    %v13 = vld [vmem:[%s0 + $0x8] sm:$0xff]
    %v14 = vld [vmem:[%s0 + $0x10] sm:$0xff]
    %v15 = vld [vmem:[%s0 + $0x18] sm:$0xff]
    %v16 = vld [vmem:[%s0 + $0x20] sm:$0xff]
    %v17 = vld [vmem:[%s0 + $0x28] sm:$0xff]
    %v18 = vld [vmem:[%s0 + $0x30] sm:$0xff]
    %v19 = vld [vmem:[%s0 + $0x38] sm:$0xff]
    %v20 = vld [vmem:[%s1] sm:$0xff]
    %v21 = vld [vmem:[%s1 + $0x8] sm:$0xff]
    %v22 = vld [vmem:[%s1 + $0x10] sm:$0xff]
    %v23 = vld [vmem:[%s1 + $0x18] sm:$0xff]
    %vm24 = vcmask 261120
    %v26 = vsel %vm24, %v12, 0
    %v29 = vsel %vm24, %v13, 0
    %v32 = vsel %vm24, %v14, 0
    %v35 = vsel %vm24, %v15, 0
    %v38 = vsel %vm24, %v16, 0
    %v41 = vsel %vm24, %v17, 0
    %v44 = vsel %vm24, %v18, 0
    %v47 = vsel %vm24, %v19, 0
    %49 = vmatprep.subr.mxu0 0.0
    %50 = vmatpush1.msra.mxu0 0.0
    %51 = vmatprep.subr.mxu0 0.0
    %52 = vmatpush1.msra.mxu0 0.0
    %53 = vmatprep.subr.mxu0 0.0
    %54 = vmatpush1.msra.mxu0 0.0
    %55 = vmatprep.subr.mxu0 0.0
    %56 = vmatpush1.msra.mxu0 0.0
    %57 = vmatprep.subr.mxu0 0.0
    %58 = vmatpush1.msra.mxu0 0.0
    %59 = vmatprep.subr.mxu0 0.0
    %60 = vmatpush1.msra.mxu0 0.0
    %61 = vmatprep.subr.mxu0 0.0
    %62 = vmatpush1.msra.mxu0 0.0
    %63 = vmatprep.subr.mxu0 0.0
    %64 = vmatpush1.msra.mxu0 0.0
    %65 = vmatprep.subr.mxu0 0.0
    %66 = vmatpush1.msra.mxu0 0.0
    %67 = vmatprep.subr.mxu0 0.0
    %68 = vmatpush1.msra.mxu0 0.0
    %69 = vmatprep.subr.mxu0 0.0
    %70 = vmatpush1.msra.mxu0 0.0
    %71 = vmatprep.subr.mxu0 0.0
    %72 = vmatpush1.msra.mxu0 0.0
    %73 = vmatprep.subr.mxu0 0.0
    %74 = vmatpush1.msra.mxu0 %v23
    %75 = vmatprep.subr.mxu0 0.0
    %76 = vmatpush1.msra.mxu0 %v22
    %77 = vmatprep.subr.mxu0 0.0
    %78 = vmatpush1.msra.mxu0 %v21
    %79 = vmatprep.subr.mxu0 0.0
    %80 = vmatpush1.msra.mxu0 %v20
    %81 = vmatprep.subr.mxu0 0.0
    %82 = vmatpush2.msra.mxu0 0.0
    %83 = vmatprep.subr.mxu0 0.0
    %84 = vmatpush2.msra.mxu0 0.0
    %85 = vmatprep.subr.mxu0 0.0
    %86 = vmatpush2.msra.mxu0 0.0
    %87 = vmatprep.subr.mxu0 0.0
    %88 = vmatpush2.msra.mxu0 0.0
    %89 = vmatprep.subr.mxu0 0.0
    %90 = vmatpush2.msra.mxu0 0.0
    %91 = vmatprep.subr.mxu0 0.0
    %92 = vmatpush2.msra.mxu0 0.0
    %93 = vmatprep.subr.mxu0 0.0
    %94 = vmatpush2.msra.mxu0 0.0
    %95 = vmatprep.subr.mxu0 0.0
    %96 = vmatpush2.msra.mxu0 0.0
    %97 = vmatprep.subr.mxu0 0.0
    %98 = vmatpush2.msra.mxu0 0.0
    %99 = vmatprep.subr.mxu0 0.0
    %100 = vmatpush2.msra.mxu0 0.0
    %101 = vmatprep.subr.mxu0 0.0
    %102 = vmatpush2.msra.mxu0 0.0
    %103 = vmatprep.subr.mxu0 0.0
    %104 = vmatpush2.msra.mxu0 0.0
    %105 = vmatprep.subr.mxu0 0.0
    %106 = vmatpush2.msra.mxu0 0.0
    %107 = vmatprep.subr.mxu0 0.0
    %108 = vmatpush2.msra.mxu0 0.0
    %109 = vmatprep.subr.mxu0 0.0
    %110 = vmatpush2.msra.mxu0 0.0
    %111 = vmatprep.subr.mxu0 0.0
    %112 = vmatpush2.msra.mxu0 0.0
    %113 = vmatprep.mubr.f32.mxu0 0.0
    %114 = vmatmul.mubr.f32.gmra.mxu0 %v26
    %v115 = vpop.f32.mrf.mxu0
    %v116 = vadd.f32 0.0, %v115
    %v117 = vpop.f32.mrf.mxu0
    %118 = vmatprep.mubr.f32.mxu0 0.0
    %119 = vmatmul.mubr.f32.gmra.mxu0 %v29
    %v120 = vpop.f32.mrf.mxu0
    %v121 = vadd.f32 0.0, %v120
    %v122 = vpop.f32.mrf.mxu0
    %123 = vmatprep.mubr.f32.mxu0 0.0
    %124 = vmatmul.mubr.f32.gmra.mxu0 %v32
    %v125 = vpop.f32.mrf.mxu0
    %v126 = vadd.f32 0.0, %v125
    %v127 = vpop.f32.mrf.mxu0
    %128 = vmatprep.mubr.f32.mxu0 0.0
    %129 = vmatmul.mubr.f32.gmra.mxu0 %v35
    %v130 = vpop.f32.mrf.mxu0
    %v131 = vadd.f32 0.0, %v130
    %v132 = vpop.f32.mrf.mxu0
    %133 = vmatprep.mubr.f32.mxu0 0.0
    %134 = vmatmul.mubr.f32.gmra.mxu0 %v38
    %v135 = vpop.f32.mrf.mxu0
    %v136 = vadd.f32 0.0, %v135
    %v137 = vpop.f32.mrf.mxu0
    %138 = vmatprep.mubr.f32.mxu0 0.0
    %139 = vmatmul.mubr.f32.gmra.mxu0 %v41
    %v140 = vpop.f32.mrf.mxu0
    %v141 = vadd.f32 0.0, %v140
    %v142 = vpop.f32.mrf.mxu0
    %143 = vmatprep.mubr.f32.mxu0 0.0
    %144 = vmatmul.mubr.f32.gmra.mxu0 %v44
    %v145 = vpop.f32.mrf.mxu0
    %v146 = vadd.f32 0.0, %v145
    %v147 = vpop.f32.mrf.mxu0
    %148 = vmatprep.mubr.f32.mxu0 0.0
    %149 = vmatmul.mubr.f32.gmra.mxu0 %v47
    %v150 = vpop.f32.mrf.mxu0
    %v151 = vadd.f32 0.0, %v150
    %v152 = vpop.f32.mrf.mxu0
    %153 = vdwg.mxu0
    %154 = vst [vmem:[#allocation2] sm:$0xff] %v116
    %155 = vst [vmem:[#allocation2 + $0x8] sm:$0xff] %v121
    %156 = vst [vmem:[#allocation2 + $0x10] sm:$0xff] %v126
    %157 = vst [vmem:[#allocation2 + $0x18] sm:$0xff] %v131
    %158 = vst [vmem:[#allocation2 + $0x20] sm:$0xff] %v136
    %159 = vst [vmem:[#allocation2 + $0x28] sm:$0xff] %v141
    %160 = vst [vmem:[#allocation2 + $0x30] sm:$0xff] %v146
    %161 = vst [vmem:[#allocation2 + $0x38] sm:$0xff] %v151
    // Predicated region
    $region10: #{tpu_custom_call.1} parent=1 // pred_check
      _
    $region11: #{tpu_custom_call.1} parent=1 // pred_check_branch
      %163 = sbr.rel (0) target = $region13
    $region12: #{tpu_custom_call.1} parent=1 // pred_region
      %s165 = ssub.s32 1024, 1024
      %166 = vsyncadd [#allocation3], %s165
      %s167 = sshll.u32 [#allocation2], 4
      %s168 = int_to_ptr.vmem [resolvable:$true] %s167
      %173 = dma.vmem_to_hbm [thread:$0]  %s168, 1024, %s2, [#allocation3], 128, 128, 8
    $region13: #{tpu_custom_call.1} parent=1 // pred_fallthru
      _
    // Predicated region
    $region14: #{tpu_custom_call.1} parent=1 // pred_check
      _
    $region15: #{tpu_custom_call.1} parent=1 // pred_check_branch
      %175 = sbr.rel (0) target = $region17
    $region16: #{tpu_custom_call.1} parent=1 // pred_region
      %176 = dma.done [#allocation3], 1024
    $region17: #{tpu_custom_call.1} parent=1 // pred_fallthru
      _
    %177 = vsyncpa [#allocation3], 1

</llo_original>
